<compile_context>
chip_gen: v7x
topology: tpu7x:2x2x1
jax: 0.10.0
libtpu: 0.0.40
codegen_flags: <defaults>
</compile_context>

<pallas_src>
import jax
import jax.numpy as jnp
from jax import lax
from jax.experimental import pallas as pl
from jax.experimental.pallas import tpu as pltpu


def _cdiv(a: int, b: int) -> int:
    return -(-a // b)


def _select_tiling(batch: int, sub_rows: int, max_tile_b: int):
    """Returns (tile_b, sub, n_sub, num_tiles)."""
    if batch <= sub_rows:
        # Single tile covering the whole (small) batch; block == full array.
        return batch, batch, 1, 1
    sub = sub_rows
    n_chunks = _cdiv(batch, sub)
    max_chunks_per_tile = max(max_tile_b // sub, 1)
    # At least 2 grid steps (v7x megacore), ideally an even number.
    num_tiles = max(2, _cdiv(n_chunks, max_chunks_per_tile))
    if num_tiles % 2:
        num_tiles += 1
    chunks_per_tile = _cdiv(n_chunks, num_tiles)
    num_tiles = _cdiv(n_chunks, chunks_per_tile)   # drop fully-empty tiles
    tile_b = chunks_per_tile * sub
    return tile_b, sub, chunks_per_tile, num_tiles


def _make_critic_kernel(sub: int, n_sub: int, unroll: int):
    """`sub` rows per inner step, `n_sub` inner steps per grid tile."""

    def kernel(s_ref, a_ref, w1s_ref, w1a_ref, b1_ref, w2_ref, b2_ref,
               w3_ref, b3_ref, o_ref):
        # Weights/biases: small, constant index_map -> resident in VMEM.
        w1s = w1s_ref[...]
        w1a = w1a_ref[...]
        b1 = b1_ref[...]
        w2 = w2_ref[...]
        b2 = b2_ref[...]
        w3 = w3_ref[...]          # (1, hidden)
        b3 = b3_ref[...]          # (1, 1)

        def q_row(s, a):
            # Layer 1 with fused concat: x @ W1 == s @ W1[:sd] + a @ W1[sd:]
            h1 = (jnp.dot(s, w1s, preferred_element_type=jnp.float32)
                  + jnp.dot(a, w1a, preferred_element_type=jnp.float32)
                  + b1)
            h1 = jnp.maximum(h1, 0.0)                       # ReLU
            h2 = jnp.dot(h1, w2, preferred_element_type=jnp.float32) + b2
            h2 = jnp.maximum(h2, 0.0)                       # ReLU
            # Final (hidden -> 1) layer on VPU (mul) + XLU (lane reduce); the
            # (rows,) -> (1, rows) relayout gives a lane-dense result row.
            return jnp.sum(h2 * w3, axis=-1)[None, :] + b3  # (1, rows)

        if n_sub == 1:
            o_ref[...] = q_row(s_ref[...], a_ref[...]).astype(o_ref.dtype)
        else:
            def body(j, carry):
                off = pl.multiple_of(j * sub, sub)
                q = q_row(s_ref[pl.ds(off, sub), :],
                          a_ref[pl.ds(off, sub), :])
                o_ref[:, pl.ds(off, sub)] = q.astype(o_ref.dtype)
                return carry

            lax.fori_loop(0, n_sub, body, 0, unroll=unroll)

    return kernel


def critic_forward(state, action, params, *, max_tile_b: int = 8192,
                   sub_rows: int = 256):
    """Pallas implementation of Critic.forward.

    state:  [B, state_dim]  float32
    action: [B, action_dim] float32
    returns [B, 1] float32
    """
    w1, b1, w2, b2, w3, b3 = params
    batch, state_dim = state.shape
    action_dim = action.shape[1]
    in_dim = state_dim + action_dim
    hidden = w1.shape[1]
    assert w1.shape[0] == in_dim
    assert w3.shape == (hidden, 1)   # w3.reshape(1, hidden) only valid for a 1-wide head

    # Fuse the concat by splitting the first-layer weight (tiny host-side slice).
    w1s = w1[:state_dim, :]
    w1a = w1[state_dim:, :]
    w3_row = w3.reshape(1, hidden)
    b1r = b1.reshape(1, hidden)
    b2r = b2.reshape(1, hidden)
    b3r = b3.reshape(1, 1)

    tile_b, sub, n_sub, num_tiles = _select_tiling(batch, sub_rows, max_tile_b)
    unroll = n_sub if n_sub <= 4 else 2

    flops = 2 * batch * (in_dim * hidden + hidden * hidden + hidden)
    bytes_accessed = 4 * (batch * (in_dim + 1)
                          + in_dim * hidden + hidden * hidden
                          + 2 * hidden + hidden + 1)
    cost = pl.CostEstimate(flops=flops, transcendentals=0,
                           bytes_accessed=bytes_accessed)

    kernel = _make_critic_kernel(sub, n_sub, unroll)

    out = pl.pallas_call(
        kernel,
        # Lane-dense output slab: row i holds the Q values of grid tile i.
        out_shape=jax.ShapeDtypeStruct((num_tiles, tile_b), jnp.float32),
        grid=(num_tiles,),
        in_specs=[
            # Batch-tiled inputs (last tile may overhang the array; those rows
            # are garbage-in/garbage-out and sliced off below).
            pl.BlockSpec((tile_b, state_dim), lambda i: (i, 0)),
            pl.BlockSpec((tile_b, action_dim), lambda i: (i, 0)),
            # Weights/biases: constant index_map -> resident across grid steps.
            pl.BlockSpec((state_dim, hidden), lambda i: (0, 0)),
            pl.BlockSpec((action_dim, hidden), lambda i: (0, 0)),
            pl.BlockSpec((1, hidden), lambda i: (0, 0)),
            pl.BlockSpec((hidden, hidden), lambda i: (0, 0)),
            pl.BlockSpec((1, hidden), lambda i: (0, 0)),
            pl.BlockSpec((1, hidden), lambda i: (0, 0)),
            pl.BlockSpec((1, 1), lambda i: (0, 0)),
        ],
        out_specs=pl.BlockSpec((1, tile_b), lambda i: (i, 0)),
        compiler_params=pltpu.CompilerParams(
            dimension_semantics=("parallel",),
            vmem_limit_bytes=48 * 1024 * 1024),
        cost_estimate=cost,
    )(state, action, w1s, w1a, b1r, w2, b2r, w3_row, b3r)

    # Row r of the batch lives at flat index r of the (num_tiles, tile_b) slab.
    return out.reshape(-1)[:batch].reshape(batch, 1)


def init_critic_params(key, state_dim, action_dim, hidden_dim):
    """Deterministic init mirroring nn.Linear default (U(-1/sqrt(fan_in), 1/sqrt(fan_in)))."""
    in_dim = state_dim + action_dim
    dims = [(in_dim, hidden_dim), (hidden_dim, hidden_dim), (hidden_dim, 1)]
    params = []
    for (fan_in, fan_out) in dims:
        key, kw, kb = jax.random.split(key, 3)
        bound = 1.0 / jnp.sqrt(jnp.float32(fan_in))
        w = jax.random.uniform(kw, (fan_in, fan_out), jnp.float32, -bound, bound)
        b = jax.random.uniform(kb, (1, fan_out), jnp.float32, -bound, bound)
        params.extend([w, b])
    return tuple(params)


def critic_reference(state, action, params):
    """Plain-JAX reference (HIGHEST matmul precision) for correctness check."""
    w1, b1, w2, b2, w3, b3 = params
    hp = jax.lax.Precision.HIGHEST
    x = jnp.concatenate([state, action], axis=1)
    h1 = jnp.maximum(jnp.dot(x, w1, precision=hp) + b1, 0.0)
    h2 = jnp.maximum(jnp.dot(h1, w2, precision=hp) + b2, 0.0)
    return jnp.dot(h2, w3, precision=hp) + b3


if __name__ == "__main__":
    state_dim, action_dim, hidden_dim = 12, 4, 32

    key = jax.random.PRNGKey(0)
    key, kp = jax.random.split(key)
    params = init_critic_params(kp, state_dim, action_dim, hidden_dim)

    # Case 1: tiny batch (single full-array tile, no inner loop).
    # Case 2: ragged batch > sub_rows (2 grid steps, ragged boundary tile).
    # Case 3: batch large enough to exercise the inner sub-chunk fori_loop
    #         (n_sub > 1) plus the ragged boundary tile.
    for b in (8, 300, 1030):
        key, ks, ka = jax.random.split(key, 3)
        state = jax.random.normal(ks, (b, state_dim), jnp.float32)
        action = jax.random.normal(ka, (b, action_dim), jnp.float32)
        q = jax.block_until_ready(critic_forward(state, action, params))
        q_ref = critic_reference(state, action, params)
        assert q.shape == (b, 1), (b, q.shape)
        # Loose-ish tolerance: accommodates MXU pass-precision differences
        # between the Pallas matmuls and the XLA reference while still
        # catching any layout / row-indexing bug (those produce O(1) errors).
        assert jnp.allclose(q, q_ref, atol=2e-2, rtol=2e-2), (
            b, float(jnp.max(jnp.abs(q - q_ref))))

    print("KERNEL_OK")
</pallas_src>

<mosaic_0001>
module attributes {stable_mosaic.version = 11 : i64} {
  func.func @kernel(%arg0: i32, %arg1: memref<8x12xf32, #tpu.memory_space<vmem>>, %arg2: memref<8x4xf32, #tpu.memory_space<vmem>>, %arg3: memref<12x32xf32, #tpu.memory_space<vmem>>, %arg4: memref<4x32xf32, #tpu.memory_space<vmem>>, %arg5: memref<1x32xf32, #tpu.memory_space<vmem>>, %arg6: memref<32x32xf32, #tpu.memory_space<vmem>>, %arg7: memref<1x32xf32, #tpu.memory_space<vmem>>, %arg8: memref<1x32xf32, #tpu.memory_space<vmem>>, %arg9: memref<1x1xf32, #tpu.memory_space<vmem>>, %arg10: memref<1x8xf32, #tpu.memory_space<vmem>>) attributes {dimension_semantics = [#tpu.dimension_semantics<parallel>], iteration_bounds = array<i64: 1>, scalar_prefetch = 0 : i64, scratch_operands = 0 : i64, tpu.core_type = #tpu.core_type<tc>, window_params = [{transform_indices = @transform_0, window_bounds = array<i64: 8, 12>}, {transform_indices = @transform_1, window_bounds = array<i64: 8, 4>}, {pipeline_mode = #tpu.pipeline_mode<synchronous>, transform_indices = @transform_2, window_bounds = array<i64: 12, 32>}, {pipeline_mode = #tpu.pipeline_mode<synchronous>, transform_indices = @transform_3, window_bounds = array<i64: 4, 32>}, {pipeline_mode = #tpu.pipeline_mode<synchronous>, transform_indices = @transform_4, window_bounds = array<i64: 1, 32>}, {pipeline_mode = #tpu.pipeline_mode<synchronous>, transform_indices = @transform_5, window_bounds = array<i64: 32, 32>}, {pipeline_mode = #tpu.pipeline_mode<synchronous>, transform_indices = @transform_6, window_bounds = array<i64: 1, 32>}, {pipeline_mode = #tpu.pipeline_mode<synchronous>, transform_indices = @transform_7, window_bounds = array<i64: 1, 32>}, {pipeline_mode = #tpu.pipeline_mode<synchronous>, transform_indices = @transform_8, window_bounds = array<i64: 1, 1>}, {transform_indices = @transform_9, window_bounds = array<i64: 1, 8>}]} {
    %c0 = arith.constant 0 : index
    %c0_0 = arith.constant 0 : index
    %0 = vector.load %arg3[%c0, %c0_0] : memref<12x32xf32, #tpu.memory_space<vmem>>, vector<12x32xf32>
    %c0_1 = arith.constant 0 : index
    %c0_2 = arith.constant 0 : index
    %1 = vector.load %arg4[%c0_1, %c0_2] : memref<4x32xf32, #tpu.memory_space<vmem>>, vector<4x32xf32>
    %c0_3 = arith.constant 0 : index
    %c0_4 = arith.constant 0 : index
    %2 = vector.load %arg5[%c0_3, %c0_4] : memref<1x32xf32, #tpu.memory_space<vmem>>, vector<1x32xf32>
    %c0_5 = arith.constant 0 : index
    %c0_6 = arith.constant 0 : index
    %3 = vector.load %arg6[%c0_5, %c0_6] : memref<32x32xf32, #tpu.memory_space<vmem>>, vector<32x32xf32>
    %c0_7 = arith.constant 0 : index
    %c0_8 = arith.constant 0 : index
    %4 = vector.load %arg7[%c0_7, %c0_8] : memref<1x32xf32, #tpu.memory_space<vmem>>, vector<1x32xf32>
    %c0_9 = arith.constant 0 : index
    %c0_10 = arith.constant 0 : index
    %5 = vector.load %arg8[%c0_9, %c0_10] : memref<1x32xf32, #tpu.memory_space<vmem>>, vector<1x32xf32>
    %c0_11 = arith.constant 0 : index
    %c0_12 = arith.constant 0 : index
    %6 = vector.load %arg9[%c0_11, %c0_12] : memref<1x1xf32, #tpu.memory_space<vmem>>, vector<1x1xf32>
    %c0_13 = arith.constant 0 : index
    %c0_14 = arith.constant 0 : index
    %7 = vector.load %arg1[%c0_13, %c0_14] : memref<8x12xf32, #tpu.memory_space<vmem>>, vector<8x12xf32>
    %c0_15 = arith.constant 0 : index
    %c0_16 = arith.constant 0 : index
    %8 = vector.load %arg2[%c0_15, %c0_16] : memref<8x4xf32, #tpu.memory_space<vmem>>, vector<8x4xf32>
    %cst = arith.constant dense<0.000000e+00> : vector<8x32xf32>
    %9 = tpu.matmul %7, %0, %cst {dimension_numbers = #tpu.dot_dimension_numbers<[1], [0], [0], [1], [0, 0, 1, 1], [], []>} : vector<8x12xf32>, vector<12x32xf32>, vector<8x32xf32> -> vector<8x32xf32>
    %cst_17 = arith.constant dense<0.000000e+00> : vector<8x32xf32>
    %10 = tpu.matmul %8, %1, %cst_17 {dimension_numbers = #tpu.dot_dimension_numbers<[1], [0], [0], [1], [0, 0, 1, 1], [], []>} : vector<8x4xf32>, vector<4x32xf32>, vector<8x32xf32> -> vector<8x32xf32>
    %11 = arith.addf %9, %10 : vector<8x32xf32>
    %12 = vector.broadcast %2 : vector<1x32xf32> to vector<8x32xf32>
    %13 = arith.addf %11, %12 : vector<8x32xf32>
    %cst_18 = arith.constant 0.000000e+00 : f32
    %14 = vector.broadcast %cst_18 : f32 to vector<8x32xf32>
    %15 = arith.maximumf %13, %14 : vector<8x32xf32>
    %cst_19 = arith.constant dense<0.000000e+00> : vector<8x32xf32>
    %16 = tpu.matmul %15, %3, %cst_19 {dimension_numbers = #tpu.dot_dimension_numbers<[1], [0], [0], [1], [0, 0, 1, 1], [], []>} : vector<8x32xf32>, vector<32x32xf32>, vector<8x32xf32> -> vector<8x32xf32>
    %17 = vector.broadcast %4 : vector<1x32xf32> to vector<8x32xf32>
    %18 = arith.addf %16, %17 : vector<8x32xf32>
    %cst_20 = arith.constant 0.000000e+00 : f32
    %19 = vector.broadcast %cst_20 : f32 to vector<8x32xf32>
    %20 = arith.maximumf %18, %19 : vector<8x32xf32>
    %21 = vector.broadcast %5 : vector<1x32xf32> to vector<8x32xf32>
    %22 = arith.mulf %20, %21 : vector<8x32xf32>
    %cst_21 = arith.constant dense<0.000000e+00> : vector<8xf32>
    %23 = vector.multi_reduction <add>, %22, %cst_21 [1] : vector<8x32xf32> to vector<8xf32>
    %24 = vector.shape_cast %23 : vector<8xf32> to vector<1x8xf32>
    %25 = vector.broadcast %6 : vector<1x1xf32> to vector<1x8xf32>
    %26 = arith.addf %24, %25 : vector<1x8xf32>
    %c0_22 = arith.constant 0 : index
    %c0_23 = arith.constant 0 : index
    %27 = vector.load %arg10[%c0_22, %c0_23] : memref<1x8xf32, #tpu.memory_space<vmem>>, vector<1x8xf32>
    tpu.vector_store %arg10[%c0_22, %c0_23], %26 {strides = array<i32>} : memref<1x8xf32, #tpu.memory_space<vmem>>, vector<1x8xf32>,
    return
  }
  func.func @transform_0(%arg0: i32) -> (i32, i32) {
    %c0_i32 = arith.constant 0 : i32
    %c0_i32_0 = arith.constant 0 : i32
    return %arg0, %c0_i32 : i32, i32
  }
  func.func @transform_1(%arg0: i32) -> (i32, i32) {
    %c0_i32 = arith.constant 0 : i32
    %c0_i32_0 = arith.constant 0 : i32
    return %arg0, %c0_i32 : i32, i32
  }
  func.func @transform_2(%arg0: i32) -> (i32, i32) {
    %c0_i32 = arith.constant 0 : i32
    %c0_i32_0 = arith.constant 0 : i32
    %c0_i32_1 = arith.constant 0 : i32
    return %c0_i32, %c0_i32_0 : i32, i32
  }
  func.func @transform_3(%arg0: i32) -> (i32, i32) {
    %c0_i32 = arith.constant 0 : i32
    %c0_i32_0 = arith.constant 0 : i32
    %c0_i32_1 = arith.constant 0 : i32
    return %c0_i32, %c0_i32_0 : i32, i32
  }
  func.func @transform_4(%arg0: i32) -> (i32, i32) {
    %c0_i32 = arith.constant 0 : i32
    %c0_i32_0 = arith.constant 0 : i32
    %c0_i32_1 = arith.constant 0 : i32
    return %c0_i32, %c0_i32_0 : i32, i32
  }
  func.func @transform_5(%arg0: i32) -> (i32, i32) {
    %c0_i32 = arith.constant 0 : i32
    %c0_i32_0 = arith.constant 0 : i32
    %c0_i32_1 = arith.constant 0 : i32
    return %c0_i32, %c0_i32_0 : i32, i32
  }
  func.func @transform_6(%arg0: i32) -> (i32, i32) {
    %c0_i32 = arith.constant 0 : i32
    %c0_i32_0 = arith.constant 0 : i32
    %c0_i32_1 = arith.constant 0 : i32
    return %c0_i32, %c0_i32_0 : i32, i32
  }
  func.func @transform_7(%arg0: i32) -> (i32, i32) {
    %c0_i32 = arith.constant 0 : i32
    %c0_i32_0 = arith.constant 0 : i32
    %c0_i32_1 = arith.constant 0 : i32
    return %c0_i32, %c0_i32_0 : i32, i32
  }
  func.func @transform_8(%arg0: i32) -> (i32, i32) {
    %c0_i32 = arith.constant 0 : i32
    %c0_i32_0 = arith.constant 0 : i32
    %c0_i32_1 = arith.constant 0 : i32
    return %c0_i32, %c0_i32_0 : i32, i32
  }
  func.func @transform_9(%arg0: i32) -> (i32, i32) {
    %c0_i32 = arith.constant 0 : i32
    %c0_i32_0 = arith.constant 0 : i32
    return %arg0, %c0_i32 : i32, i32
  }
}

</mosaic_0001>

<llo_original>
// kernel: tpu_custom_call.1
$region0: #{tpu_custom_call.1}
  #allocation0 [shape = 'u32[]', space=smem, size = 0x4, offset = 0x4, fixed_abs, tag = 'smem constant byte address 0x4 - core index']
  #allocation1 [shape = 'u32[144,128]{1,0:T(1,128)}', space=vmem, size = 0x12000, scoped, tag = 'internal scratch']
  #allocation2 [shape = 'f32[1,1]{1,0:T(1,128)S(1)}', space=vmem, size = 0x200, scoped, tag = 'scoped memory for tpu_custom_call.1']
  %s0 = inlined_call_operand.hbm [shape: f32[8,12], index: 0, kind: input, shape index: {}]
  %s1 = inlined_call_operand.vmem [shape: f32[8,4], index: 1, kind: input, shape index: {}]
  %s2 = inlined_call_operand.hbm [shape: f32[12,32], index: 2, kind: input, shape index: {}]
  %s3 = inlined_call_operand.hbm [shape: f32[4,32], index: 3, kind: input, shape index: {}]
  %s4 = inlined_call_operand.vmem [shape: f32[1,32], index: 4, kind: input, shape index: {}]
  %s5 = inlined_call_operand.vmem [shape: f32[32,32], index: 5, kind: input, shape index: {}]
  %s6 = inlined_call_operand.vmem [shape: f32[1,32], index: 6, kind: input, shape index: {}]
  %s7 = inlined_call_operand.vmem [shape: f32[1,32], index: 7, kind: input, shape index: {}]
  %s8 = inlined_call_operand.<no memory space> [shape: f32[1,1], index: 8, kind: input, shape index: {}]
  %s9 = inlined_call_operand.hbm [shape: f32[1,8], index: 9, kind: output, shape index: {}]
  %s10 = sld [smem:[#allocation0]]
  $region58: #{tpu_custom_call.1} parent=0
    _
  %s12 = ssub.s32 1, %s10
  %s13 = scalar_select 0, %s12, %s10
  %v14 = vstv %s8
  %15 = vst [vmem:[#allocation2] sm:$0x1] %v14
  $region1: #{tpu_custom_call.1} parent=0
    #allocation3 [shape = 'u8[4096]{0}', space=vmem, size = 0x1000, scoped, tag = 'input window, operand 0, single buffered']
    #allocation4 [shape = 's32[1]{0}', space=sflag, size = 0x4, scoped, tag = 'scoped memory for tpu_custom_call.1']
    #allocation5 [shape = 's32[1]{0}', space=sflag, size = 0x4, scoped, tag = 'scoped memory for tpu_custom_call.1']
    #allocation6 [shape = 'u8[8192]{0}', space=vmem, size = 0x2000, scoped, tag = 'input window, operand 2, single buffered']
    #allocation7 [shape = 's32[1]{0}', space=sflag, size = 0x4, scoped, tag = 'scoped memory for tpu_custom_call.1']
    #allocation8 [shape = 'u8[2048]{0}', space=vmem, size = 0x800, scoped, tag = 'input window, operand 3, single buffered']
    #allocation9 [shape = 'u8[512]{0}', space=vmem, size = 0x400, scoped, tag = 'output window, operand 0, single buffered']
    %16 = vsyncpa [#allocation4], 0
    %17 = vsyncpa [#allocation7], 0
    %18 = vsyncpa [#allocation5], 0
    // Predicated region
    $region2: #{tpu_custom_call.1} parent=1 // pred_check
      _
    $region3: #{tpu_custom_call.1} parent=1 // pred_check_branch
      %20 = sbr.rel (0) target = $region5
    $region4: #{tpu_custom_call.1} parent=1 // pred_region
      %s22 = ssub.s32 128, 128
      %23 = vsyncadd [#allocation4], %s22
      %s25 = sshll.u32 [#allocation3], 4
      %s26 = int_to_ptr.vmem [resolvable:$true] %s25
      %28 = dma.hbm_to_vmem [thread:$0]  %s0, 128, %s26, [#allocation4]
    $region5: #{tpu_custom_call.1} parent=1 // pred_fallthru
      _
    // Predicated region
    $region6: #{tpu_custom_call.1} parent=1 // pred_check
      _
    $region7: #{tpu_custom_call.1} parent=1 // pred_check_branch
      %30 = sbr.rel (0) target = $region9
    $region8: #{tpu_custom_call.1} parent=1 // pred_region
      _
    $region9: #{tpu_custom_call.1} parent=1 // pred_fallthru
      _
    // Predicated region
    $region10: #{tpu_custom_call.1} parent=1 // pred_check
      _
    $region11: #{tpu_custom_call.1} parent=1 // pred_check_branch
      %32 = sbr.rel (0) target = $region13
    $region12: #{tpu_custom_call.1} parent=1 // pred_region
      %s34 = ssub.s32 256, 256
      %35 = vsyncadd [#allocation7], %s34
      %s36 = sshll.u32 [#allocation6], 4
      %s37 = int_to_ptr.vmem [resolvable:$true] %s36
      %42 = dma.hbm_to_vmem [thread:$0]  %s2, 256, %s37, [#allocation7], 128, 128, 8
    $region13: #{tpu_custom_call.1} parent=1 // pred_fallthru
      _
    // Predicated region
    $region14: #{tpu_custom_call.1} parent=1 // pred_check
      _
    $region15: #{tpu_custom_call.1} parent=1 // pred_check_branch
      %44 = sbr.rel (0) target = $region17
    $region16: #{tpu_custom_call.1} parent=1 // pred_region
      %s46 = ssub.s32 64, 64
      %47 = vsyncadd [#allocation7], %s46
      %s49 = sshll.u32 [#allocation8], 4
      %s50 = int_to_ptr.vmem [resolvable:$true] %s49
      %52 = dma.hbm_to_vmem [thread:$0]  %s3, 64, %s50, [#allocation7]
    $region17: #{tpu_custom_call.1} parent=1 // pred_fallthru
      _
    // Predicated region
    $region18: #{tpu_custom_call.1} parent=1 // pred_check
      _
    $region19: #{tpu_custom_call.1} parent=1 // pred_check_branch
      %54 = sbr.rel (0) target = $region21
    $region20: #{tpu_custom_call.1} parent=1 // pred_region
      _
    $region21: #{tpu_custom_call.1} parent=1 // pred_fallthru
      _
    // Predicated region
    $region22: #{tpu_custom_call.1} parent=1 // pred_check
      _
    $region23: #{tpu_custom_call.1} parent=1 // pred_check_branch
      %56 = sbr.rel (0) target = $region25
    $region24: #{tpu_custom_call.1} parent=1 // pred_region
      _
    $region25: #{tpu_custom_call.1} parent=1 // pred_fallthru
      _
    // Predicated region
    $region26: #{tpu_custom_call.1} parent=1 // pred_check
      _
    $region27: #{tpu_custom_call.1} parent=1 // pred_check_branch
      %58 = sbr.rel (0) target = $region29
    $region28: #{tpu_custom_call.1} parent=1 // pred_region
      _
    $region29: #{tpu_custom_call.1} parent=1 // pred_fallthru
      _
    // Predicated region
    $region30: #{tpu_custom_call.1} parent=1 // pred_check
      _
    $region31: #{tpu_custom_call.1} parent=1 // pred_check_branch
      %60 = sbr.rel (0) target = $region33
    $region32: #{tpu_custom_call.1} parent=1 // pred_region
      _
    $region33: #{tpu_custom_call.1} parent=1 // pred_fallthru
      _
    // Predicated region
    $region34: #{tpu_custom_call.1} parent=1 // pred_check
      _
    $region35: #{tpu_custom_call.1} parent=1 // pred_check_branch
      %62 = sbr.rel (0) target = $region37
    $region36: #{tpu_custom_call.1} parent=1 // pred_region
      _
    $region37: #{tpu_custom_call.1} parent=1 // pred_fallthru
      _
    // Predicated region
    $region38: #{tpu_custom_call.1} parent=1 // pred_check
      _
    $region39: #{tpu_custom_call.1} parent=1 // pred_check_branch
      %64 = sbr.rel (0) target = $region41
    $region40: #{tpu_custom_call.1} parent=1 // pred_region
      %65 = dma.done [#allocation4], 128
    $region41: #{tpu_custom_call.1} parent=1 // pred_fallthru
      _
    // Predicated region
    $region42: #{tpu_custom_call.1} parent=1 // pred_check
      _
    $region43: #{tpu_custom_call.1} parent=1 // pred_check_branch
      %67 = sbr.rel (0) target = $region45
    $region44: #{tpu_custom_call.1} parent=1 // pred_region
      %68 = dma.done [#allocation7], 256
    $region45: #{tpu_custom_call.1} parent=1 // pred_fallthru
      _
    // Predicated region
    $region46: #{tpu_custom_call.1} parent=1 // pred_check
      _
    $region47: #{tpu_custom_call.1} parent=1 // pred_check_branch
      %70 = sbr.rel (0) target = $region49
    $region48: #{tpu_custom_call.1} parent=1 // pred_region
      %71 = dma.done [#allocation7], 64
    $region49: #{tpu_custom_call.1} parent=1 // pred_fallthru
      _
    %v72 = vld [vmem:[#allocation6] sm:$0xff]
    %v73 = vld [vmem:[#allocation6 + $0x8] sm:$0xf]
    %v74 = vld [vmem:[#allocation8] sm:$0xf]
    %v75 = vld [vmem:[%s4] sm:$0x1]
    %v76 = vld [vmem:[%s5] sm:$0xff]
    %v77 = vld [vmem:[%s5 + $0x8] sm:$0xff]
    %v78 = vld [vmem:[%s5 + $0x10] sm:$0xff]
    %v79 = vld [vmem:[%s5 + $0x18] sm:$0xff]
    %v80 = vld [vmem:[%s6] sm:$0x1]
    %v81 = vld [vmem:[%s7] sm:$0x1]
    %v82 = vld [vmem:[#allocation2] sm:$0x1]
    %v83 = vld [vmem:[#allocation3] sm:$0xff]
    %v84 = vld [vmem:[%s1] sm:$0xff]
    %vm85 = vcmask 31744
    %v87 = vsel %vm85, %v84, 0
    %vm89 = vcmask 1043456
    %v91 = vsel %vm89, %v74, 0
    %93 = vmatprep.subr.mxu0 0.0
    %94 = vmatpush1.msra.mxu0 %v91
    %95 = vmatprep.subr.mxu0 0.0
    %96 = vmatpush1.msra.mxu0 0.0
    %97 = vmatprep.subr.mxu0 0.0
    %98 = vmatpush1.msra.mxu0 0.0
    %99 = vmatprep.subr.mxu0 0.0
    %100 = vmatpush1.msra.mxu0 0.0
    %101 = vmatprep.subr.mxu0 0.0
    %102 = vmatpush1.msra.mxu0 0.0
    %103 = vmatprep.subr.mxu0 0.0
    %104 = vmatpush1.msra.mxu0 0.0
    %105 = vmatprep.subr.mxu0 0.0
    %106 = vmatpush1.msra.mxu0 0.0
    %107 = vmatprep.subr.mxu0 0.0
    %108 = vmatpush1.msra.mxu0 0.0
    %109 = vmatprep.subr.mxu0 0.0
    %110 = vmatpush1.msra.mxu0 0.0
    %111 = vmatprep.subr.mxu0 0.0
    %112 = vmatpush1.msra.mxu0 0.0
    %113 = vmatprep.subr.mxu0 0.0
    %114 = vmatpush1.msra.mxu0 0.0
    %115 = vmatprep.subr.mxu0 0.0
    %116 = vmatpush1.msra.mxu0 0.0
    %117 = vmatprep.subr.mxu0 0.0
    %118 = vmatpush1.msra.mxu0 0.0
    %119 = vmatprep.subr.mxu0 0.0
    %120 = vmatpush1.msra.mxu0 0.0
    %121 = vmatprep.subr.mxu0 0.0
    %122 = vmatpush1.msra.mxu0 0.0
    %123 = vmatprep.subr.mxu0 0.0
    %124 = vmatpush1.msra.mxu0 0.0
    %125 = vmatprep.subr.mxu0 0.0
    %126 = vmatpush1.msra.mxu0 0.0
    %127 = vmatprep.subr.mxu0 0.0
    %128 = vmatpush1.msra.mxu0 0.0
    %129 = vmatprep.subr.mxu0 0.0
    %130 = vmatpush1.msra.mxu0 0.0
    %131 = vmatprep.subr.mxu0 0.0
    %132 = vmatpush1.msra.mxu0 0.0
    %133 = vmatprep.subr.mxu0 0.0
    %134 = vmatpush1.msra.mxu0 0.0
    %135 = vmatprep.subr.mxu0 0.0
    %136 = vmatpush1.msra.mxu0 0.0
    %137 = vmatprep.subr.mxu0 0.0
    %138 = vmatpush1.msra.mxu0 0.0
    %139 = vmatprep.subr.mxu0 0.0
    %140 = vmatpush1.msra.mxu0 0.0
    %141 = vmatprep.subr.mxu0 0.0
    %142 = vmatpush1.msra.mxu0 0.0
    %143 = vmatprep.subr.mxu0 0.0
    %144 = vmatpush1.msra.mxu0 0.0
    %145 = vmatprep.subr.mxu0 0.0
    %146 = vmatpush1.msra.mxu0 0.0
    %147 = vmatprep.subr.mxu0 0.0
    %148 = vmatpush1.msra.mxu0 0.0
    %149 = vmatprep.subr.mxu0 0.0
    %150 = vmatpush1.msra.mxu0 0.0
    %151 = vmatprep.subr.mxu0 0.0
    %152 = vmatpush1.msra.mxu0 0.0
    %153 = vmatprep.subr.mxu0 0.0
    %154 = vmatpush1.msra.mxu0 0.0
    %155 = vmatprep.subr.mxu0 0.0
    %156 = vmatpush1.msra.mxu0 0.0
    %157 = vmatprep.mubr.f32.mxu0 0.0
    %158 = vmatmul.mubr.f32.gmra.mrb[0].mxu0 %v87
    %v159 = vpop.f32.mrb[0].mxu0
    %v160 = vadd.f32 0.0, %v159
    %v161 = vpop.f32.mrb[0].mxu0
    %162 = vdwg.mxu0
    %vm163 = vcmask 97280
    %v165 = vsel %vm163, %v83, 0
    %v168 = vsel %vm89, %v73, 0
    %170 = vmatprep.subr.mxu0 0.0
    %171 = vmatpush1.msra.mxu0 %v72
    %172 = vmatprep.subr.mxu0 0.0
    %173 = vmatpush1.msra.mxu0 %v168
    %174 = vmatprep.subr.mxu0 0.0
    %175 = vmatpush1.msra.mxu0 0.0
    %176 = vmatprep.subr.mxu0 0.0
    %177 = vmatpush1.msra.mxu0 0.0
    %178 = vmatprep.subr.mxu0 0.0
    %179 = vmatpush1.msra.mxu0 0.0
    %180 = vmatprep.subr.mxu0 0.0
    %181 = vmatpush1.msra.mxu0 0.0
    %182 = vmatprep.subr.mxu0 0.0
    %183 = vmatpush1.msra.mxu0 0.0
    %184 = vmatprep.subr.mxu0 0.0
    %185 = vmatpush1.msra.mxu0 0.0
    %186 = vmatprep.subr.mxu0 0.0
    %187 = vmatpush1.msra.mxu0 0.0
    %188 = vmatprep.subr.mxu0 0.0
    %189 = vmatpush1.msra.mxu0 0.0
    %190 = vmatprep.subr.mxu0 0.0
    %191 = vmatpush1.msra.mxu0 0.0
    %192 = vmatprep.subr.mxu0 0.0
    %193 = vmatpush1.msra.mxu0 0.0
    %194 = vmatprep.subr.mxu0 0.0
    %195 = vmatpush1.msra.mxu0 0.0
    %196 = vmatprep.subr.mxu0 0.0
    %197 = vmatpush1.msra.mxu0 0.0
    %198 = vmatprep.subr.mxu0 0.0
    %199 = vmatpush1.msra.mxu0 0.0
    %200 = vmatprep.subr.mxu0 0.0
    %201 = vmatpush1.msra.mxu0 0.0
    %202 = vmatprep.subr.mxu0 0.0
    %203 = vmatpush1.msra.mxu0 0.0
    %204 = vmatprep.subr.mxu0 0.0
    %205 = vmatpush1.msra.mxu0 0.0
    %206 = vmatprep.subr.mxu0 0.0
    %207 = vmatpush1.msra.mxu0 0.0
    %208 = vmatprep.subr.mxu0 0.0
    %209 = vmatpush1.msra.mxu0 0.0
    %210 = vmatprep.subr.mxu0 0.0
    %211 = vmatpush1.msra.mxu0 0.0
    %212 = vmatprep.subr.mxu0 0.0
    %213 = vmatpush1.msra.mxu0 0.0
    %214 = vmatprep.subr.mxu0 0.0
    %215 = vmatpush1.msra.mxu0 0.0
    %216 = vmatprep.subr.mxu0 0.0
    %217 = vmatpush1.msra.mxu0 0.0
    %218 = vmatprep.subr.mxu0 0.0
    %219 = vmatpush1.msra.mxu0 0.0
    %220 = vmatprep.subr.mxu0 0.0
    %221 = vmatpush1.msra.mxu0 0.0
    %222 = vmatprep.subr.mxu0 0.0
    %223 = vmatpush1.msra.mxu0 0.0
    %224 = vmatprep.subr.mxu0 0.0
    %225 = vmatpush1.msra.mxu0 0.0
    %226 = vmatprep.subr.mxu0 0.0
    %227 = vmatpush1.msra.mxu0 0.0
    %228 = vmatprep.subr.mxu0 0.0
    %229 = vmatpush1.msra.mxu0 0.0
    %230 = vmatprep.subr.mxu0 0.0
    %231 = vmatpush1.msra.mxu0 0.0
    %232 = vmatprep.subr.mxu0 0.0
    %233 = vmatpush1.msra.mxu0 0.0
    %234 = vmatprep.mubr.f32.mxu0 0.0
    %235 = vmatmul.mubr.f32.gmra.mrb[0].mxu0 %v165
    %v236 = vpop.f32.mrb[0].mxu0
    %v237 = vadd.f32 %v160, %v236
    %v238 = vpop.f32.mrb[0].mxu0
    %239 = vdwg.mxu0
    %v241 = vlaneseq
    %v242 = vshrl.u32 %v241, 7
    %v243 = vsub.s32 0, %v242
    %v244 = vrot.slane %v75, %v243
    %v246 = vadd.f32 %v237, %v244
    %v247 = vmax.f32 %v246, 0.0
    %v249 = vlaneseq
    %v250 = vshrl.u32 %v249, 7
    %v251 = vsub.s32 0, %v250
    %v252 = vrot.slane %v80, %v251
    %vm254 = vcmask 261120
    %v256 = vsel %vm254, %v247, 0
    %258 = vmatprep.subr.mxu0 0.0
    %259 = vmatpush1.msra.mxu0 %v76
    %260 = vmatprep.subr.mxu0 0.0
    %261 = vmatpush1.msra.mxu0 %v77
    %262 = vmatprep.subr.mxu0 0.0
    %263 = vmatpush1.msra.mxu0 %v78
    %264 = vmatprep.subr.mxu0 0.0
    %265 = vmatpush1.msra.mxu0 %v79
    %266 = vmatprep.subr.mxu0 0.0
    %267 = vmatpush1.msra.mxu0 0.0
    %268 = vmatprep.subr.mxu0 0.0
    %269 = vmatpush1.msra.mxu0 0.0
    %270 = vmatprep.subr.mxu0 0.0
    %271 = vmatpush1.msra.mxu0 0.0
    %272 = vmatprep.subr.mxu0 0.0
    %273 = vmatpush1.msra.mxu0 0.0
    %274 = vmatprep.subr.mxu0 0.0
    %275 = vmatpush1.msra.mxu0 0.0
    %276 = vmatprep.subr.mxu0 0.0
    %277 = vmatpush1.msra.mxu0 0.0
    %278 = vmatprep.subr.mxu0 0.0
    %279 = vmatpush1.msra.mxu0 0.0
    %280 = vmatprep.subr.mxu0 0.0
    %281 = vmatpush1.msra.mxu0 0.0
    %282 = vmatprep.subr.mxu0 0.0
    %283 = vmatpush1.msra.mxu0 0.0
    %284 = vmatprep.subr.mxu0 0.0
    %285 = vmatpush1.msra.mxu0 0.0
    %286 = vmatprep.subr.mxu0 0.0
    %287 = vmatpush1.msra.mxu0 0.0
    %288 = vmatprep.subr.mxu0 0.0
    %289 = vmatpush1.msra.mxu0 0.0
    %290 = vmatprep.subr.mxu0 0.0
    %291 = vmatpush1.msra.mxu0 0.0
    %292 = vmatprep.subr.mxu0 0.0
    %293 = vmatpush1.msra.mxu0 0.0
    %294 = vmatprep.subr.mxu0 0.0
    %295 = vmatpush1.msra.mxu0 0.0
    %296 = vmatprep.subr.mxu0 0.0
    %297 = vmatpush1.msra.mxu0 0.0
    %298 = vmatprep.subr.mxu0 0.0
    %299 = vmatpush1.msra.mxu0 0.0
    %300 = vmatprep.subr.mxu0 0.0
    %301 = vmatpush1.msra.mxu0 0.0
    %302 = vmatprep.subr.mxu0 0.0
    %303 = vmatpush1.msra.mxu0 0.0
    %304 = vmatprep.subr.mxu0 0.0
    %305 = vmatpush1.msra.mxu0 0.0
    %306 = vmatprep.subr.mxu0 0.0
    %307 = vmatpush1.msra.mxu0 0.0
    %308 = vmatprep.subr.mxu0 0.0
    %309 = vmatpush1.msra.mxu0 0.0
    %310 = vmatprep.subr.mxu0 0.0
    %311 = vmatpush1.msra.mxu0 0.0
    %312 = vmatprep.subr.mxu0 0.0
    %313 = vmatpush1.msra.mxu0 0.0
    %314 = vmatprep.subr.mxu0 0.0
    %315 = vmatpush1.msra.mxu0 0.0
    %316 = vmatprep.subr.mxu0 0.0
    %317 = vmatpush1.msra.mxu0 0.0
    %318 = vmatprep.subr.mxu0 0.0
    %319 = vmatpush1.msra.mxu0 0.0
    %320 = vmatprep.subr.mxu0 0.0
    %321 = vmatpush1.msra.mxu0 0.0
    %322 = vmatprep.mubr.f32.mxu0 0.0
    %323 = vmatmul.mubr.f32.gmra.mrb[0].mxu0 %v256
    %v324 = vpop.f32.mrb[0].mxu0
    %v325 = vadd.f32 %v252, %v324
    %v326 = vpop.f32.mrb[0].mxu0
    %327 = vdwg.mxu0
    %v328 = vmax.f32 %v325, 0.0
    %v330 = vlaneseq
    %v331 = vshrl.u32 %v330, 7
    %v332 = vsub.s32 0, %v331
    %v333 = vrot.slane %v81, %v332
    %v335 = vmul.f32 %v328, %v333
    %v336 = vsel %vm254, %v335, 0.0
    %337 = vadd.xlane.f32.xlu0 %v336
    %v338 = vpop.xlane.xlu0 %337
    %340 = vset.pattern.permute.xlu0 0
    %341 = vperm.xlu0 %340, %v82
    %v342 = vpop.permute.xlu0 %341
    %v344 = vlaneseq
    %v345 = vshrl.u32 %v344, 7
    %v346 = vsub.s32 0, %v345
    %v347 = vrot.slane %v342, %v346
    %v348 = vadd.f32 %v338, %v347
    %v350 = vlaneseq
    %v351 = vand.u32 %v350, 127
    %v352 = vlaneseq
    %v353 = vshrl.u32 %v352, 7
    %v354 = vsub.s32 %v351, %v353
    %v355 = vrot.slane %v348, %v354
    %vm357 = vcmask 57344
    %358 = vst.msk [vmem:[#allocation9] sm:$0x1] %vm357, %v355
    // Predicated region
    $region50: #{tpu_custom_call.1} parent=1 // pred_check
      _
    $region51: #{tpu_custom_call.1} parent=1 // pred_check_branch
      %360 = sbr.rel (0) target = $region53
    $region52: #{tpu_custom_call.1} parent=1 // pred_region
      %s362 = ssub.s32 16, 16
      %363 = vsyncadd [#allocation5], %s362
      %s365 = sshll.u32 [#allocation9], 4
      %s366 = int_to_ptr.vmem [resolvable:$true] %s365
      %368 = dma.vmem_to_hbm [thread:$0]  %s366, 16, %s9, [#allocation5]
    $region53: #{tpu_custom_call.1} parent=1 // pred_fallthru
      _
    // Predicated region
    $region54: #{tpu_custom_call.1} parent=1 // pred_check
      _
    $region55: #{tpu_custom_call.1} parent=1 // pred_check_branch
      %370 = sbr.rel (0) target = $region57
    $region56: #{tpu_custom_call.1} parent=1 // pred_region
      %371 = dma.done [#allocation5], 16
    $region57: #{tpu_custom_call.1} parent=1 // pred_fallthru
      _
    %372 = vsyncpa [#allocation4], 1
    %373 = vsyncpa [#allocation7], 1
    %374 = vsyncpa [#allocation5], 1

</llo_original>
